<compile_context>
chip_gen: v5e
topology: v5e:2x2
jax: 0.10.0
libtpu: 0.0.40
codegen_flags: <defaults>
</compile_context>

<pallas_src>
import jax
import jax.numpy as jnp
from jax.experimental import pallas as pl
from jax.experimental.pallas import tpu as pltpu


_LANE_CANDIDATES = (4096, 2048, 1024, 512, 256, 128)
_TARGET_BLOCK_BYTES = 4 * 1024 * 1024   # ~4 MiB/block; x4 live (in+out, 2-deep) = 16 MiB
_VMEM_LIMIT_BYTES = 32 * 1024 * 1024    # 2x headroom over the 16 MiB working set


def _sigmoid10_kernel(x_ref, o_ref):
    # Memory-bound: compute in f32 regardless of input dtype (matches the
    # PyTorch reference more tightly for bf16/f16; VPU/EUP slack makes the
    # upcast free), cast back on store.
    x = x_ref[...].astype(jnp.float32)
    o_ref[...] = jax.nn.sigmoid(x * 10.0).astype(o_ref.dtype)


def _sublane_multiple(dtype) -> int:
    # f32 -> 8, bf16/f16 -> 16, int8/fp8 -> 32 (sub-32-bit dtypes pack
    # sublane-wise inside a vreg).
    itemsize = jnp.dtype(dtype).itemsize
    return 8 * max(1, 4 // max(1, itemsize))


def _num_tensorcores() -> int:
    # Best-effort query; defaults to the conservative single-TC behavior
    # (v5e/v6e) if the info is unavailable.
    try:
        info = pltpu.get_tpu_info()
    except Exception:
        return 1
    for attr in ("num_cores", "core_count", "num_tensorcores", "tensorcore_count"):
        v = getattr(info, attr, None)
        if isinstance(v, int) and v > 0:
            return v
    return 1


def _sigmoid10_2d(x2: jax.Array) -> jax.Array:
    """Run the kernel on a lane-dense (rows, lane_w) view."""
    rows, lane_w = x2.shape
    dtype = x2.dtype
    itemsize = jnp.dtype(dtype).itemsize
    sub = _sublane_multiple(dtype)

    # Byte-budgeted row tile, rounded down to the sublane multiple.
    tr = max(sub, (_TARGET_BLOCK_BYTES // (lane_w * itemsize)) // sub * sub)
    if rows <= tr:
        if _num_tensorcores() >= 2 and rows >= 2 * sub:
            # Keep exactly 2 (balanced) grid steps so both v7x TensorCores
            # get work.  On single-TC parts this branch is skipped: an extra
            # serial grid step would be pure per-step overhead.
            half = -(-rows // 2)
            tr = max(sub, -(-half // sub) * sub)
        else:
            tr = rows  # single full-extent block (block == full array dims)
    grid = (pl.cdiv(rows, tr),)

    n = rows * lane_w
    cost = pl.CostEstimate(
        flops=3 * n,            # scale, exp-arg add, divide
        transcendentals=n,      # one exp per element
        bytes_accessed=2 * n * itemsize,
    )

    return pl.pallas_call(
        _sigmoid10_kernel,
        out_shape=jax.ShapeDtypeStruct((rows, lane_w), dtype),
        grid_spec=pltpu.PrefetchScalarGridSpec(
            num_scalar_prefetch=0,
            grid=grid,
            in_specs=[pl.BlockSpec((tr, lane_w), lambda i: (i, 0))],
            out_specs=pl.BlockSpec((tr, lane_w), lambda i: (i, 0)),
        ),
        compiler_params=pltpu.CompilerParams(
            dimension_semantics=("parallel",),
            vmem_limit_bytes=_VMEM_LIMIT_BYTES,
        ),
        cost_estimate=cost,
    )(x2)


def sigmoid10(x: jax.Array) -> jax.Array:
    orig_shape = x.shape
    dtype = x.dtype
    if not jnp.issubdtype(dtype, jnp.floating):
        # torch.sigmoid also rejects integer tensors; don't silently truncate.
        raise TypeError(f"Sigmoid expects a floating-point input, got {dtype}.")

    n = x.size
    if n == 0:
        return x

    flat = x.reshape(-1)

    # Widest lane-dense view that divides the element count exactly
    # (copy-free reshape, unmasked full-width stores).
    lane_w = next((c for c in _LANE_CANDIDATES if n % c == 0), None)
    if lane_w is not None:
        return _sigmoid10_2d(flat.reshape(n // lane_w, lane_w)).reshape(orig_shape)

    # Ragged size (n % 128 != 0): kernel on the largest 1024-divisible prefix,
    # plain-JAX sigmoid on the tiny tail.  Avoids jnp.pad + output slice
    # (two extra full HBM passes just for <1024 tail elements).
    tail_w = 1024
    prefix = (n // tail_w) * tail_w
    if prefix == 0:
        # Tiny ragged array: one full-extent block (block shape == array shape).
        return _sigmoid10_2d(flat.reshape(1, n)).reshape(orig_shape)
    head = _sigmoid10_2d(flat[:prefix].reshape(prefix // tail_w, tail_w)).reshape(-1)
    tail = jax.nn.sigmoid(10.0 * flat[prefix:].astype(jnp.float32)).astype(dtype)
    return jnp.concatenate([head, tail]).reshape(orig_shape)


if __name__ == "__main__":
    key = jax.random.PRNGKey(0)
    # Small NCHW-style input consistent with the module's usage.
    x = jax.random.normal(key, (2, 4, 16, 16), dtype=jnp.float32)

    y = sigmoid10(x)
    y = jax.block_until_ready(y)

    # Reference check in plain JAX: torch.sigmoid(10 * x).
    y_ref = jax.nn.sigmoid(10.0 * x)
    assert y.shape == x.shape and y.dtype == x.dtype
    assert jnp.max(jnp.abs(y - y_ref)) < 1e-5

    print("KERNEL_OK")
</pallas_src>

<mosaic_0001>
module attributes {stable_mosaic.version = 11 : i64} {
  func.func @_sigmoid10_kernel(%arg0: i32, %arg1: memref<1x2048xf32, #tpu.memory_space<vmem>>, %arg2: memref<1x2048xf32, #tpu.memory_space<vmem>>) attributes {dimension_semantics = [#tpu.dimension_semantics<parallel>], iteration_bounds = array<i64: 1>, scalar_prefetch = 0 : i64, scratch_operands = 0 : i64, tpu.core_type = #tpu.core_type<tc>, window_params = [{transform_indices = @transform_0, window_bounds = array<i64: 1, 2048>}, {transform_indices = @transform_1, window_bounds = array<i64: 1, 2048>}]} {
    %c0 = arith.constant 0 : index
    %c0_0 = arith.constant 0 : index
    %0 = vector.load %arg1[%c0, %c0_0] : memref<1x2048xf32, #tpu.memory_space<vmem>>, vector<1x2048xf32>
    %cst = arith.constant 1.000000e+01 : f32
    %1 = vector.broadcast %cst : f32 to vector<1x2048xf32>
    %2 = arith.mulf %0, %1 : vector<1x2048xf32>
    %3 = arith.negf %2 : vector<1x2048xf32>
    %4 = math.exp %3 : vector<1x2048xf32>
    %cst_1 = arith.constant 1.000000e+00 : f32
    %5 = vector.broadcast %cst_1 : f32 to vector<1x2048xf32>
    %6 = arith.addf %5, %4 : vector<1x2048xf32>
    %7 = arith.divf %5, %6 : vector<1x2048xf32>
    %c0_2 = arith.constant 0 : index
    %c0_3 = arith.constant 0 : index
    %8 = vector.load %arg2[%c0_2, %c0_3] : memref<1x2048xf32, #tpu.memory_space<vmem>>, vector<1x2048xf32>
    tpu.vector_store %arg2[%c0_2, %c0_3], %7 {strides = array<i32>} : memref<1x2048xf32, #tpu.memory_space<vmem>>, vector<1x2048xf32>,
    return
  }
  func.func @transform_0(%arg0: i32) -> (i32, i32) {
    %c0_i32 = arith.constant 0 : i32
    %c0_i32_0 = arith.constant 0 : i32
    return %arg0, %c0_i32 : i32, i32
  }
  func.func @transform_1(%arg0: i32) -> (i32, i32) {
    %c0_i32 = arith.constant 0 : i32
    %c0_i32_0 = arith.constant 0 : i32
    return %arg0, %c0_i32 : i32, i32
  }
}

</mosaic_0001>

<llo_original>
// kernel: tpu_custom_call.1
$region0: #{tpu_custom_call.1}
  #allocation0 [shape = 'u32[]', space=smem, size = 0x4, offset = 0x4, fixed_abs, tag = 'smem constant byte address 0x4 - core index']
  #allocation1 [shape = 'u32[72,128]{1,0:T(1,128)}', space=vmem, size = 0x9000, scoped, tag = 'internal scratch']
  %s0 = inlined_call_operand.hbm [shape: f32[1,2048], index: 0, kind: input, shape index: {}]
  %s1 = inlined_call_operand.hbm [shape: f32[1,2048], index: 1, kind: output, shape index: {}]
  %s2 = sld [smem:[#allocation0]]
  $region18: #{tpu_custom_call.1} parent=0
    _
  %s4 = ssub.s32 1, %s2
  %s5 = scalar_select 0, %s4, %s2
  $region1: #{tpu_custom_call.1} parent=0
    #allocation2 [shape = 'u8[8192]{0}', space=vmem, size = 0x2000, scoped, tag = 'input window, operand 0, single buffered']
    #allocation3 [shape = 's32[1]{0}', space=sflag, size = 0x4, scoped, tag = 'scoped memory for tpu_custom_call.1']
    #allocation4 [shape = 's32[1]{0}', space=sflag, size = 0x4, scoped, tag = 'scoped memory for tpu_custom_call.1']
    #allocation5 [shape = 'u8[8192]{0}', space=vmem, size = 0x2000, scoped, tag = 'output window, operand 0, single buffered']
    %6 = vsyncpa [#allocation3], 0
    %7 = vsyncpa [#allocation4], 0
    // Predicated region
    $region2: #{tpu_custom_call.1} parent=1 // pred_check
      _
    $region3: #{tpu_custom_call.1} parent=1 // pred_check_branch
      %9 = sbr.rel (0) target = $region5
    $region4: #{tpu_custom_call.1} parent=1 // pred_region
      %11 = vsyncadd [#allocation3], 0
      %s13 = sshll.u32 %s0, 4
      %s14 = int_to_ptr.hbm [resolvable:$true] %s13
      %s15 = sshll.u32 [#allocation2], 4
      %s16 = int_to_ptr.vmem [resolvable:$true] %s15
      %18 = dma.hbm_to_vmem [thread:$0]  %s14, 256, %s16, [#allocation3]
    $region5: #{tpu_custom_call.1} parent=1 // pred_fallthru
      _
    // Predicated region
    $region6: #{tpu_custom_call.1} parent=1 // pred_check
      _
    $region7: #{tpu_custom_call.1} parent=1 // pred_check_branch
      %20 = sbr.rel (0) target = $region9
    $region8: #{tpu_custom_call.1} parent=1 // pred_region
      %22 = dma.done [#allocation3], 256
    $region9: #{tpu_custom_call.1} parent=1 // pred_fallthru
      _
    %v23 = vld [vmem:[#allocation2] sm:$0xff]
    %v24 = vld [vmem:[#allocation2 + $0x8] sm:$0xff]
    %v25 = vmul.f32 %v23, 10.0
    %v26 = vmul.f32 %v24, 10.0
    %v27 = vxor.u32 %v25, 2147483648
    %v28 = vxor.u32 %v26, 2147483648
    %v29 = vmul.f32 %v27, 1.442695
    %v30 = vpow.pop %v29
    %v31 = vmul.f32 %v28, 1.442695
    %v32 = vpow.pop %v31
    %v33 = vadd.f32 %v30, 1.0
    %v34 = vadd.f32 %v32, 1.0
    %v35 = vrcp.pop %v33
    %v36 = vmul.f32 %v33, %v35
    %v37 = vsub.f32 1.0, %v36
    %v38 = vmul.f32 %v35, %v37
    %v39 = vadd.f32 %v35, %v38
    %vm40 = vweird.f32 %v33
    %vm41 = vweird.f32 %v35
    %vm42 = vmor %vm40, %vm41
    %v43 = vsel %vm42, %v35, %v39
    %v44 = vand.u32 2147483647, %v33
    %vm45 = vcmp.eq.f32.partialorder %v44, 8.507059e+37
    %v46 = vand.u32 %v33, 2147483648
    %v47 = vor.u32 1.1754944e-38, %v46
    %v48 = vsel %vm45, %v47, %v43
    %v49 = vmul.f32 1.0, %v48
    %v50 = vrcp.pop %v34
    %v51 = vmul.f32 %v34, %v50
    %v52 = vsub.f32 1.0, %v51
    %v53 = vmul.f32 %v50, %v52
    %v54 = vadd.f32 %v50, %v53
    %vm55 = vweird.f32 %v34
    %vm56 = vweird.f32 %v50
    %vm57 = vmor %vm55, %vm56
    %v58 = vsel %vm57, %v50, %v54
    %v59 = vand.u32 2147483647, %v34
    %vm60 = vcmp.eq.f32.partialorder %v59, 8.507059e+37
    %v61 = vand.u32 %v34, 2147483648
    %v62 = vor.u32 1.1754944e-38, %v61
    %v63 = vsel %vm60, %v62, %v58
    %v64 = vmul.f32 1.0, %v63
    %65 = vst [vmem:[#allocation5] sm:$0xff] %v49
    %66 = vst [vmem:[#allocation5 + $0x8] sm:$0xff] %v64
    // Predicated region
    $region10: #{tpu_custom_call.1} parent=1 // pred_check
      _
    $region11: #{tpu_custom_call.1} parent=1 // pred_check_branch
      %68 = sbr.rel (0) target = $region13
    $region12: #{tpu_custom_call.1} parent=1 // pred_region
      %70 = vsyncadd [#allocation4], 0
      %s72 = sshll.u32 [#allocation5], 4
      %s73 = int_to_ptr.vmem [resolvable:$true] %s72
      %s74 = sshll.u32 %s1, 4
      %s75 = int_to_ptr.hbm [resolvable:$true] %s74
      %77 = dma.vmem_to_hbm [thread:$0]  %s73, 256, %s75, [#allocation4]
    $region13: #{tpu_custom_call.1} parent=1 // pred_fallthru
      _
    // Predicated region
    $region14: #{tpu_custom_call.1} parent=1 // pred_check
      _
    $region15: #{tpu_custom_call.1} parent=1 // pred_check_branch
      %79 = sbr.rel (0) target = $region17
    $region16: #{tpu_custom_call.1} parent=1 // pred_region
      %81 = dma.done [#allocation4], 256
    $region17: #{tpu_custom_call.1} parent=1 // pred_fallthru
      _
    %82 = vsyncpa [#allocation3], 1
    %83 = vsyncpa [#allocation4], 1

</llo_original>
